<compile_context>
chip_gen: v7x
topology: tpu7x:2x2x1
jax: 0.10.0
libtpu: 0.0.40
codegen_flags: <defaults>
</compile_context>

<pallas_src>
import jax
import jax.numpy as jnp
from jax.experimental import pallas as pl
from jax.experimental.pallas import tpu as pltpu


# ----------------------------------------------------------------------------
# Small-shape path: whole arrays in VMEM, no grid, fused matmul + bias.
# block_shape == full array dims satisfies the (8,128) rule via the
# "equal full array dims" escape.
# ----------------------------------------------------------------------------
def _mm_add_small_kernel(x1_ref, x2_ref, o_ref):
    acc = jnp.dot(x1_ref[...], x2_ref[...], preferred_element_type=jnp.float32)
    o_ref[...] = (acc + 1.5).astype(o_ref.dtype)


def _mm_add_small(x1, x2):
    M, K = x1.shape
    _, N = x2.shape
    return pl.pallas_call(
        _mm_add_small_kernel,
        out_shape=jax.ShapeDtypeStruct((M, N), jnp.float32),
        in_specs=[
            pl.BlockSpec(memory_space=pltpu.MemorySpace.VMEM),
            pl.BlockSpec(memory_space=pltpu.MemorySpace.VMEM),
        ],
        out_specs=pl.BlockSpec(memory_space=pltpu.MemorySpace.VMEM),
    )(x1, x2)


# ----------------------------------------------------------------------------
# Scalable template path: canonical pipelined MXU matmul with K-reduction
# accumulator and fused +1.5 epilogue on the final K step.
# ----------------------------------------------------------------------------
def _mm_add_tiled_kernel(x1_ref, x2_ref, o_ref, acc_ref):
    @pl.when(pl.program_id(2) == 0)
    def _():
        acc_ref[...] = jnp.zeros_like(acc_ref)

    acc_ref[...] += jnp.dot(
        x1_ref[...], x2_ref[...], preferred_element_type=jnp.float32
    )

    @pl.when(pl.program_id(2) == pl.num_programs(2) - 1)
    def _():
        o_ref[...] = (acc_ref[...] + 1.5).astype(o_ref.dtype)


def _mm_add_tiled(x1, x2, *, tm=256, tn=256, tk=512):
    M, K = x1.shape
    _, N = x2.shape
    return pl.pallas_call(
        _mm_add_tiled_kernel,
        out_shape=jax.ShapeDtypeStruct((M, N), jnp.float32),
        grid_spec=pltpu.PrefetchScalarGridSpec(
            num_scalar_prefetch=0,
            grid=(M // tm, N // tn, K // tk),
            in_specs=[
                pl.BlockSpec((tm, tk), lambda i, j, k: (i, k)),
                pl.BlockSpec((tk, tn), lambda i, j, k: (k, j)),
            ],
            out_specs=pl.BlockSpec((tm, tn), lambda i, j, k: (i, j)),
            scratch_shapes=[pltpu.VMEM((tm, tn), jnp.float32)],
        ),
        compiler_params=pltpu.CompilerParams(
            dimension_semantics=("parallel", "parallel", "arbitrary"),
        ),
    )(x1, x2)


def model_forward(x1, x2):
    M, K = x1.shape
    K2, N = x2.shape
    assert K == K2

    tm, tn, tk = 256, 256, 512
    use_tiled = (M % tm == 0) and (N % tn == 0) and (K % tk == 0)

    if use_tiled:
        out = _mm_add_tiled(x1, x2, tm=tm, tn=tn, tk=tk)
    else:
        # Tiny / non-divisible shapes: single whole-block VMEM call, no grid.
        out = _mm_add_small(x1, x2)

    # torch.squeeze semantics: only drop size-1 dims (static check -> no-op
    # emits nothing into the graph for (3,3)).
    if 1 in out.shape:
        out = jnp.squeeze(out)
    return out


if __name__ == "__main__":
    key = jax.random.PRNGKey(0)
    k1, k2 = jax.random.split(key)
    x1 = jax.random.normal(k1, (3, 3), dtype=jnp.float32)
    x2 = jax.random.normal(k2, (3, 3), dtype=jnp.float32)

    result = model_forward(x1, x2)
    jax.block_until_ready(result)

    # correctness check against plain JAX reference
    ref = jnp.squeeze(x1 @ x2) + 1.5
    assert result.shape == ref.shape
    assert jnp.allclose(result, ref, atol=1e-5, rtol=1e-5)

    print("KERNEL_OK")
</pallas_src>

<mosaic_0001>
module attributes {stable_mosaic.version = 11 : i64} {
  func.func @_mm_add_small_kernel(%arg0: memref<3x3xf32, #tpu.memory_space<vmem>>, %arg1: memref<3x3xf32, #tpu.memory_space<vmem>>, %arg2: memref<3x3xf32, #tpu.memory_space<vmem>>) attributes {dimension_semantics = [], scalar_prefetch = 0 : i64, scratch_operands = 0 : i64, tpu.core_type = #tpu.core_type<tc>} {
    %c0 = arith.constant 0 : index
    %c0_0 = arith.constant 0 : index
    %0 = vector.load %arg0[%c0, %c0_0] : memref<3x3xf32, #tpu.memory_space<vmem>>, vector<3x3xf32>
    %c0_1 = arith.constant 0 : index
    %c0_2 = arith.constant 0 : index
    %1 = vector.load %arg1[%c0_1, %c0_2] : memref<3x3xf32, #tpu.memory_space<vmem>>, vector<3x3xf32>
    %cst = arith.constant dense<0.000000e+00> : vector<3x3xf32>
    %2 = tpu.matmul %0, %1, %cst {dimension_numbers = #tpu.dot_dimension_numbers<[1], [0], [0], [1], [0, 0, 1, 1], [], []>} : vector<3x3xf32>, vector<3x3xf32>, vector<3x3xf32> -> vector<3x3xf32>
    %cst_3 = arith.constant 1.500000e+00 : f32
    %3 = vector.broadcast %cst_3 : f32 to vector<3x3xf32>
    %4 = arith.addf %2, %3 : vector<3x3xf32>
    %c0_4 = arith.constant 0 : index
    %c0_5 = arith.constant 0 : index
    %5 = vector.load %arg2[%c0_4, %c0_5] : memref<3x3xf32, #tpu.memory_space<vmem>>, vector<3x3xf32>
    tpu.vector_store %arg2[%c0_4, %c0_5], %4 {strides = array<i32>} : memref<3x3xf32, #tpu.memory_space<vmem>>, vector<3x3xf32>,
    return
  }
}

</mosaic_0001>

<llo_original>
// kernel: tpu_custom_call.1
$region0: #{tpu_custom_call.1}
  #allocation0 [shape = 'u32[]', space=smem, size = 0x4, offset = 0x4, fixed_abs, tag = 'smem constant byte address 0x4 - core index']
  #allocation1 [shape = 'u32[144,128]{1,0:T(1,128)}', space=vmem, size = 0x12000, scoped, tag = 'internal scratch']
  %s0 = inlined_call_operand.hbm [shape: f32[3,3], index: 0, kind: input, shape index: {}]
  %s1 = inlined_call_operand.hbm [shape: f32[3,3], index: 1, kind: input, shape index: {}]
  %s2 = inlined_call_operand.hbm [shape: f32[3,3], index: 2, kind: output, shape index: {}]
  %s3 = sld [smem:[#allocation0]]
  $region26: #{tpu_custom_call.1} parent=0
    _
  %s5 = ssub.s32 1, %s3
  %s6 = scalar_select 0, %s5, %s3
  $region1: #{tpu_custom_call.1} parent=0
    #allocation2 [shape = 'u8[2048]{0}', space=vmem, size = 0x800, scoped, tag = 'input window, operand 0, single buffered']
    #allocation3 [shape = 's32[1]{0}', space=sflag, size = 0x4, scoped, tag = 'scoped memory for tpu_custom_call.1']
    #allocation4 [shape = 's32[1]{0}', space=sflag, size = 0x4, scoped, tag = 'scoped memory for tpu_custom_call.1']
    #allocation5 [shape = 'u8[2048]{0}', space=vmem, size = 0x800, scoped, tag = 'input window, operand 1, single buffered']
    #allocation6 [shape = 's32[1]{0}', space=sflag, size = 0x4, scoped, tag = 'scoped memory for tpu_custom_call.1']
    #allocation7 [shape = 'u8[2048]{0}', space=vmem, size = 0x800, scoped, tag = 'output window, operand 0, single buffered']
    %7 = vsyncpa [#allocation3], 0
    %8 = vsyncpa [#allocation6], 0
    %9 = vsyncpa [#allocation4], 0
    // Predicated region
    $region2: #{tpu_custom_call.1} parent=1 // pred_check
      _
    $region3: #{tpu_custom_call.1} parent=1 // pred_check_branch
      %11 = sbr.rel (0) target = $region5
    $region4: #{tpu_custom_call.1} parent=1 // pred_region
      %s13 = ssub.s32 64, 64
      %14 = vsyncadd [#allocation3], %s13
      %s16 = sshll.u32 [#allocation2], 4
      %s17 = int_to_ptr.vmem [resolvable:$true] %s16
      %19 = dma.hbm_to_vmem [thread:$0]  %s0, 64, %s17, [#allocation3]
    $region5: #{tpu_custom_call.1} parent=1 // pred_fallthru
      _
    // Predicated region
    $region6: #{tpu_custom_call.1} parent=1 // pred_check
      _
    $region7: #{tpu_custom_call.1} parent=1 // pred_check_branch
      %21 = sbr.rel (0) target = $region9
    $region8: #{tpu_custom_call.1} parent=1 // pred_region
      %s23 = ssub.s32 64, 64
      %24 = vsyncadd [#allocation6], %s23
      %s26 = sshll.u32 [#allocation5], 4
      %s27 = int_to_ptr.vmem [resolvable:$true] %s26
      %29 = dma.hbm_to_vmem [thread:$0]  %s1, 64, %s27, [#allocation6]
    $region9: #{tpu_custom_call.1} parent=1 // pred_fallthru
      _
    // Predicated region
    $region10: #{tpu_custom_call.1} parent=1 // pred_check
      _
    $region11: #{tpu_custom_call.1} parent=1 // pred_check_branch
      %31 = sbr.rel (0) target = $region13
    $region12: #{tpu_custom_call.1} parent=1 // pred_region
      %32 = dma.done [#allocation3], 64
    $region13: #{tpu_custom_call.1} parent=1 // pred_fallthru
      _
    // Predicated region
    $region14: #{tpu_custom_call.1} parent=1 // pred_check
      _
    $region15: #{tpu_custom_call.1} parent=1 // pred_check_branch
      %34 = sbr.rel (0) target = $region17
    $region16: #{tpu_custom_call.1} parent=1 // pred_region
      %35 = dma.done [#allocation6], 64
    $region17: #{tpu_custom_call.1} parent=1 // pred_fallthru
      _
    %v36 = vld [vmem:[#allocation2] sm:$0x7]
    %v37 = vld [vmem:[#allocation5] sm:$0x7]
    %vm38 = vcmask 23552
    %v40 = vsel %vm38, %v36, 0
    %vm42 = vcmask 1042432
    %v44 = vsel %vm42, %v37, 0
    %46 = vmatprep.subr.mxu0 0.0
    %47 = vmatpush1.msra.mxu0 %v44
    %48 = vmatprep.subr.mxu0 0.0
    %49 = vmatpush1.msra.mxu0 0.0
    %50 = vmatprep.subr.mxu0 0.0
    %51 = vmatpush1.msra.mxu0 0.0
    %52 = vmatprep.subr.mxu0 0.0
    %53 = vmatpush1.msra.mxu0 0.0
    %54 = vmatprep.subr.mxu0 0.0
    %55 = vmatpush1.msra.mxu0 0.0
    %56 = vmatprep.subr.mxu0 0.0
    %57 = vmatpush1.msra.mxu0 0.0
    %58 = vmatprep.subr.mxu0 0.0
    %59 = vmatpush1.msra.mxu0 0.0
    %60 = vmatprep.subr.mxu0 0.0
    %61 = vmatpush1.msra.mxu0 0.0
    %62 = vmatprep.subr.mxu0 0.0
    %63 = vmatpush1.msra.mxu0 0.0
    %64 = vmatprep.subr.mxu0 0.0
    %65 = vmatpush1.msra.mxu0 0.0
    %66 = vmatprep.subr.mxu0 0.0
    %67 = vmatpush1.msra.mxu0 0.0
    %68 = vmatprep.subr.mxu0 0.0
    %69 = vmatpush1.msra.mxu0 0.0
    %70 = vmatprep.subr.mxu0 0.0
    %71 = vmatpush1.msra.mxu0 0.0
    %72 = vmatprep.subr.mxu0 0.0
    %73 = vmatpush1.msra.mxu0 0.0
    %74 = vmatprep.subr.mxu0 0.0
    %75 = vmatpush1.msra.mxu0 0.0
    %76 = vmatprep.subr.mxu0 0.0
    %77 = vmatpush1.msra.mxu0 0.0
    %78 = vmatprep.subr.mxu0 0.0
    %79 = vmatpush1.msra.mxu0 0.0
    %80 = vmatprep.subr.mxu0 0.0
    %81 = vmatpush1.msra.mxu0 0.0
    %82 = vmatprep.subr.mxu0 0.0
    %83 = vmatpush1.msra.mxu0 0.0
    %84 = vmatprep.subr.mxu0 0.0
    %85 = vmatpush1.msra.mxu0 0.0
    %86 = vmatprep.subr.mxu0 0.0
    %87 = vmatpush1.msra.mxu0 0.0
    %88 = vmatprep.subr.mxu0 0.0
    %89 = vmatpush1.msra.mxu0 0.0
    %90 = vmatprep.subr.mxu0 0.0
    %91 = vmatpush1.msra.mxu0 0.0
    %92 = vmatprep.subr.mxu0 0.0
    %93 = vmatpush1.msra.mxu0 0.0
    %94 = vmatprep.subr.mxu0 0.0
    %95 = vmatpush1.msra.mxu0 0.0
    %96 = vmatprep.subr.mxu0 0.0
    %97 = vmatpush1.msra.mxu0 0.0
    %98 = vmatprep.subr.mxu0 0.0
    %99 = vmatpush1.msra.mxu0 0.0
    %100 = vmatprep.subr.mxu0 0.0
    %101 = vmatpush1.msra.mxu0 0.0
    %102 = vmatprep.subr.mxu0 0.0
    %103 = vmatpush1.msra.mxu0 0.0
    %104 = vmatprep.subr.mxu0 0.0
    %105 = vmatpush1.msra.mxu0 0.0
    %106 = vmatprep.subr.mxu0 0.0
    %107 = vmatpush1.msra.mxu0 0.0
    %108 = vmatprep.subr.mxu0 0.0
    %109 = vmatpush1.msra.mxu0 0.0
    %110 = vmatprep.mubr.f32.mxu0 0.0
    %111 = vmatmul.mubr.f32.gmra.mrb[0].mxu0 %v40
    %v112 = vpop.f32.mrb[0].mxu0
    %v113 = vadd.f32 1.5, %v112
    %v114 = vpop.f32.mrb[0].mxu0
    %115 = vdwg.mxu0
    %vm116 = vcmask 18432
    %117 = vst.msk [vmem:[#allocation7] sm:$0x7] %vm116, %v113
    // Predicated region
    $region18: #{tpu_custom_call.1} parent=1 // pred_check
      _
    $region19: #{tpu_custom_call.1} parent=1 // pred_check_branch
      %119 = sbr.rel (0) target = $region21
    $region20: #{tpu_custom_call.1} parent=1 // pred_region
      %s121 = ssub.s32 64, 64
      %122 = vsyncadd [#allocation4], %s121
      %s124 = sshll.u32 [#allocation7], 4
      %s125 = int_to_ptr.vmem [resolvable:$true] %s124
      %127 = dma.vmem_to_hbm [thread:$0]  %s125, 64, %s2, [#allocation4]
    $region21: #{tpu_custom_call.1} parent=1 // pred_fallthru
      _
    // Predicated region
    $region22: #{tpu_custom_call.1} parent=1 // pred_check
      _
    $region23: #{tpu_custom_call.1} parent=1 // pred_check_branch
      %129 = sbr.rel (0) target = $region25
    $region24: #{tpu_custom_call.1} parent=1 // pred_region
      %130 = dma.done [#allocation4], 64
    $region25: #{tpu_custom_call.1} parent=1 // pred_fallthru
      _
    %131 = vsyncpa [#allocation3], 1
    %132 = vsyncpa [#allocation6], 1
    %133 = vsyncpa [#allocation4], 1

</llo_original>
